<compile_context>
chip_gen: v7x
topology: tpu7x:2x2x1
jax: 0.10.0
libtpu: 0.0.40
codegen_flags: <defaults>
</compile_context>

<pallas_src>
import jax
import jax.numpy as jnp
from jax import lax
from jax.experimental import pallas as pl
from jax.experimental.pallas import tpu as pltpu


# ---------------------------------------------------------------------------
# Helpers
# ---------------------------------------------------------------------------
def _round_up(x, m):
    return ((x + m - 1) // m) * m


def _round_down(x, m):
    return max(m, (x // m) * m)


def _sublane(dtype):
    # Sublane packing granularity: 8 rows for 32-bit, 16 for bf16, 32 for int8.
    return max(8, 32 // jnp.dtype(dtype).itemsize)


_VMEM_BUDGET = 12 * 1024 * 1024       # streamed (double-buffered) tile budget
_VMEM_LIMIT = 32 * 1024 * 1024        # scoped VMEM limit (safe on v5e/v6e/v7x)


# ---------------------------------------------------------------------------
# Pallas kernels
# ---------------------------------------------------------------------------
def _conv_patch_matmul_kernel(p_ref, w_ref, b_ref, o_ref):
    # p_ref: (1, K, TM)   w_ref: (Co, K)   b_ref: (Co, 1)   o_ref: (1, Co, TM)
    acc = jnp.dot(w_ref[...], p_ref[0], preferred_element_type=jnp.float32)
    acc = acc + b_ref[...].astype(jnp.float32)          # lane-broadcast bias
    o_ref[0] = acc.astype(o_ref.dtype)                  # lane-dense (Co, TM) store


def _avgpool_kernel(x_ref, p_ref, o_ref):
    # x_ref: (TB, 2, Ho, 2W)   p_ref: (2W, Wo) selection/scale   o_ref: (TB*Ho, Wo)
    v = x_ref[...].astype(jnp.float32)                  # (TB, 2, Ho, 2W)
    s = v[:, 0] + v[:, 1]                                # kd-pair sum on VPU
    tb, ho, w2 = s.shape
    # Layout-free collapse when Ho is sublane-aligned (typical UNet shapes);
    # otherwise Mosaic inserts a VMEM-local copy (still correct, HBM-hidden).
    s2 = s.reshape(tb * ho, w2)
    pooled = jnp.dot(s2, p_ref[...], preferred_element_type=jnp.float32)
    o_ref[...] = pooled.astype(o_ref.dtype)


# ---------------------------------------------------------------------------
# Wrappers
# ---------------------------------------------------------------------------
def downsample_conv(x, weight, bias):
    """Conv3d(kernel=2, stride=2, padding=0) downsample.

    x: (N, Ci, D, H, W); weight: (Co, Ci, 2, 2, 2); bias: (Co,)
    returns (N, Co, D//2, H//2, W//2)
    """
    N, Ci, D, H, W = x.shape
    Co = weight.shape[0]
    assert D % 2 == 0 and H % 2 == 0 and W % 2 == 0, "spatial dims must be even"
    Do, Ho, Wo = D // 2, H // 2, W // 2
    S = Do * Ho * Wo
    K = 8 * Ci
    itemsize = jnp.dtype(x.dtype).itemsize
    sub = _sublane(x.dtype)

    # TODO(synk): fuse this relayout into the kernel; blocked on a robust
    # in-kernel de-interleave of the stride-2 kw axis that lives in the lane
    # dim of NCDHW (kd/kh are easy axes, kw is not).
    xp = x.reshape(N, Ci, Do, 2, Ho, 2, Wo, 2)
    xp = jnp.transpose(xp, (0, 3, 5, 7, 1, 2, 4, 6))   # (N,kd,kh,kw,Ci,Do,Ho,Wo)
    patches_t = xp.reshape(N, K, S)

    # Weight flattened in matching (kd, kh, kw, ci) order; no Co padding.
    w_mat = jnp.transpose(weight, (0, 2, 3, 4, 1)).reshape(Co, K).astype(x.dtype)
    b_mat = bias.reshape(Co, 1).astype(jnp.float32)

    # Lane-tile TM: padding-aware VMEM accounting (double-buffered in + out).
    per_lane = 2 * (_round_up(K, sub) + _round_up(Co, sub)) * itemsize
    tm = max(128, _VMEM_BUDGET // max(1, per_lane))
    tm = min(tm, 8192)
    if N == 1 and S > 128:
        tm = min(tm, _round_up(pl.cdiv(S, 2), 128))     # >=2 steps for v7x megacore
    TM = S if S <= tm else _round_down(tm, 128)

    grid = (N, pl.cdiv(S, TM))

    out = pl.pallas_call(
        _conv_patch_matmul_kernel,
        out_shape=jax.ShapeDtypeStruct((N, Co, S), x.dtype),
        grid=grid,
        in_specs=[
            pl.BlockSpec((1, K, TM), lambda n, j: (n, 0, j)),   # streamed patches
            pl.BlockSpec((Co, K), lambda n, j: (0, 0)),         # resident weight
            pl.BlockSpec((Co, 1), lambda n, j: (0, 0)),         # resident bias
        ],
        out_specs=pl.BlockSpec((1, Co, TM), lambda n, j: (n, 0, j)),
        compiler_params=pltpu.CompilerParams(
            dimension_semantics=("parallel", "parallel"),
            vmem_limit_bytes=_VMEM_LIMIT,
        ),
        cost_estimate=pl.CostEstimate(
            flops=int(2 * N * S * K * Co),
            transcendentals=0,
            bytes_accessed=int((N * K * S + Co * K + N * Co * S) * itemsize
                               + Co * 4),
        ),
    )(patches_t, w_mat, b_mat)

    # Free (row-major preserving) reshape straight to NCDHW -- no crop, no
    # transpose pass.
    return out.reshape(N, Co, Do, Ho, Wo)


def downsample_avgpool(x):
    """AvgPool3d(kernel=2, stride=2, padding=0) downsample.

    x: (N, C, D, H, W) -> (N, C, D//2, H//2, W//2)
    """
    N, C, D, H, W = x.shape
    assert D % 2 == 0 and H % 2 == 0 and W % 2 == 0, "spatial dims must be even"
    Do, Ho, Wo = D // 2, H // 2, W // 2
    Rb = N * C * Do
    itemsize = jnp.dtype(x.dtype).itemsize
    sub = _sublane(x.dtype)

    # Free (row-major preserving) reshape: rows = (n, c, do), dims (kd, ho, kh*W+w).
    xr = x.reshape(Rb, 2, Ho, 2 * W)

    # Selection/scale matrix: P[kh*W + w, wo] = 1/8 iff w // 2 == wo.
    cols = jnp.arange(2 * W)
    wo_of_col = (cols % W) // 2
    pmat = (wo_of_col[:, None] == jnp.arange(Wo)[None, :]).astype(jnp.float32)
    pmat = pmat * 0.125

    # Row-tile TB: lane/sublane padding-aware VMEM accounting, double-buffered.
    in_bytes_per_tb = 2 * _round_up(Ho, sub) * _round_up(2 * W, 128) * itemsize
    out_bytes_per_tb = Ho * _round_up(Wo, 128) * itemsize
    per_tb = 2 * (in_bytes_per_tb + out_bytes_per_tb)
    tb = max(sub, _VMEM_BUDGET // max(1, per_tb))
    tb = min(tb, 2048)
    if Rb <= sub:
        TB = Rb
    else:
        tb = min(tb, _round_up(pl.cdiv(Rb, 2), sub))    # >=2 steps for v7x megacore
        TB = max(sub, _round_down(min(tb, Rb), sub))

    grid = (pl.cdiv(Rb, TB),)

    out_flat = pl.pallas_call(
        _avgpool_kernel,
        out_shape=jax.ShapeDtypeStruct((Rb * Ho, Wo), x.dtype),
        grid=grid,
        in_specs=[
            pl.BlockSpec((TB, 2, Ho, 2 * W), lambda i: (i, 0, 0, 0)),
            pl.BlockSpec((2 * W, Wo), lambda i: (0, 0)),          # resident P
        ],
        out_specs=pl.BlockSpec((TB * Ho, Wo), lambda i: (i, 0)),
        compiler_params=pltpu.CompilerParams(
            dimension_semantics=("parallel",),
            vmem_limit_bytes=_VMEM_LIMIT,
        ),
        cost_estimate=pl.CostEstimate(
            flops=int(2 * Rb * Ho * 2 * W * Wo + Rb * 2 * Ho * 2 * W),
            transcendentals=0,
            bytes_accessed=int((Rb * 2 * Ho * 2 * W + Rb * Ho * Wo) * itemsize
                               + 2 * W * Wo * 4),
        ),
    )(xr, pmat)

    return out_flat.reshape(N, C, Do, Ho, Wo)


def downsample(x, *, use_conv, weight=None, bias=None):
    if use_conv:
        return downsample_conv(x, weight, bias)
    return downsample_avgpool(x)


# ---------------------------------------------------------------------------
# Main
# ---------------------------------------------------------------------------
if __name__ == "__main__":
    key = jax.random.PRNGKey(0)
    k_x, k_w, k_b = jax.random.split(key, 3)

    # Small 5-D NCDHW input, as the module's forward implies.
    N, Ci, D, H, W = 2, 4, 16, 16, 16
    Co = 8
    x = jax.random.normal(k_x, (N, Ci, D, H, W), dtype=jnp.float32)

    # Deterministic synthetic parameters (Conv3d kernel_size=2, stride=2).
    fan_in = Ci * 2 * 2 * 2
    bound = 1.0 / (fan_in ** 0.5)
    weight = jax.random.uniform(
        k_w, (Co, Ci, 2, 2, 2), dtype=jnp.float32, minval=-bound, maxval=bound
    )
    bias = jax.random.uniform(
        k_b, (Co,), dtype=jnp.float32, minval=-bound, maxval=bound
    )

    # --- use_conv=True path ---
    y_conv = jax.block_until_ready(
        downsample(x, use_conv=True, weight=weight, bias=bias)
    )
    y_ref = lax.conv_general_dilated(
        x, weight, window_strides=(2, 2, 2), padding="VALID",
        dimension_numbers=("NCDHW", "OIDHW", "NCDHW"),
    ) + bias.reshape(1, Co, 1, 1, 1)
    assert y_conv.shape == (N, Co, D // 2, H // 2, W // 2)
    assert jnp.allclose(y_conv, y_ref, atol=1e-5, rtol=1e-5)

    # --- use_conv=False path (AvgPool3d, in_channels == out_channels) ---
    y_pool = jax.block_until_ready(downsample(x, use_conv=False))
    pool_ref = x.reshape(N, Ci, D // 2, 2, H // 2, 2, W // 2, 2).mean(
        axis=(3, 5, 7)
    )
    assert y_pool.shape == (N, Ci, D // 2, H // 2, W // 2)
    assert jnp.allclose(y_pool, pool_ref, atol=1e-5, rtol=1e-5)

    print("KERNEL_OK")
</pallas_src>

<mosaic_0001>
module attributes {stable_mosaic.version = 11 : i64} {
  func.func @_conv_patch_matmul_kernel(%arg0: i32, %arg1: i32, %arg2: memref<1x32x512xf32, #tpu.memory_space<vmem>>, %arg3: memref<8x32xf32, #tpu.memory_space<vmem>>, %arg4: memref<8x1xf32, #tpu.memory_space<vmem>>, %arg5: memref<1x8x512xf32, #tpu.memory_space<vmem>>) attributes {dimension_semantics = [#tpu.dimension_semantics<parallel>, #tpu.dimension_semantics<parallel>], iteration_bounds = array<i64: 2, 1>, scalar_prefetch = 0 : i64, scratch_operands = 0 : i64, tpu.core_type = #tpu.core_type<tc>, window_params = [{transform_indices = @transform_0, window_bounds = array<i64: 1, 32, 512>}, {pipeline_mode = #tpu.pipeline_mode<synchronous>, transform_indices = @transform_1, window_bounds = array<i64: 8, 32>}, {pipeline_mode = #tpu.pipeline_mode<synchronous>, transform_indices = @transform_2, window_bounds = array<i64: 8, 1>}, {transform_indices = @transform_3, window_bounds = array<i64: 1, 8, 512>}]} {
    %c0 = arith.constant 0 : index
    %c0_0 = arith.constant 0 : index
    %0 = vector.load %arg3[%c0, %c0_0] : memref<8x32xf32, #tpu.memory_space<vmem>>, vector<8x32xf32>
    %c0_1 = arith.constant 0 : index
    %c0_2 = arith.constant 0 : index
    %c0_3 = arith.constant 0 : index
    %1 = vector.load %arg2[%c0_1, %c0_2, %c0_3] : memref<1x32x512xf32, #tpu.memory_space<vmem>>, vector<1x32x512xf32>
    %2 = vector.shape_cast %1 : vector<1x32x512xf32> to vector<32x512xf32>
    %cst = arith.constant dense<0.000000e+00> : vector<8x512xf32>
    %3 = tpu.matmul %0, %2, %cst {dimension_numbers = #tpu.dot_dimension_numbers<[1], [0], [0], [1], [0, 0, 1, 1], [], []>} : vector<8x32xf32>, vector<32x512xf32>, vector<8x512xf32> -> vector<8x512xf32>
    %c0_4 = arith.constant 0 : index
    %c0_5 = arith.constant 0 : index
    %4 = vector.load %arg4[%c0_4, %c0_5] : memref<8x1xf32, #tpu.memory_space<vmem>>, vector<8x1xf32>
    %5 = vector.broadcast %4 : vector<8x1xf32> to vector<8x512xf32>
    %6 = arith.addf %3, %5 : vector<8x512xf32>
    %c0_6 = arith.constant 0 : index
    %c0_7 = arith.constant 0 : index
    %c0_8 = arith.constant 0 : index
    %7 = vector.load %arg5[%c0_6, %c0_7, %c0_8] : memref<1x8x512xf32, #tpu.memory_space<vmem>>, vector<1x8x512xf32>
    %8 = vector.shape_cast %7 : vector<1x8x512xf32> to vector<8x512xf32>
    %9 = vector.shape_cast %6 : vector<8x512xf32> to vector<1x8x512xf32>
    tpu.vector_store %arg5[%c0_6, %c0_7, %c0_8], %9 {strides = array<i32>} : memref<1x8x512xf32, #tpu.memory_space<vmem>>, vector<1x8x512xf32>,
    return
  }
  func.func @transform_0(%arg0: i32, %arg1: i32) -> (i32, i32, i32) {
    %c0_i32 = arith.constant 0 : i32
    %c0_i32_0 = arith.constant 0 : i32
    return %arg0, %c0_i32, %arg1 : i32, i32, i32
  }
  func.func @transform_1(%arg0: i32, %arg1: i32) -> (i32, i32) {
    %c0_i32 = arith.constant 0 : i32
    %c0_i32_0 = arith.constant 0 : i32
    %c0_i32_1 = arith.constant 0 : i32
    return %c0_i32, %c0_i32_0 : i32, i32
  }
  func.func @transform_2(%arg0: i32, %arg1: i32) -> (i32, i32) {
    %c0_i32 = arith.constant 0 : i32
    %c0_i32_0 = arith.constant 0 : i32
    %c0_i32_1 = arith.constant 0 : i32
    return %c0_i32, %c0_i32_0 : i32, i32
  }
  func.func @transform_3(%arg0: i32, %arg1: i32) -> (i32, i32, i32) {
    %c0_i32 = arith.constant 0 : i32
    %c0_i32_0 = arith.constant 0 : i32
    return %arg0, %c0_i32, %arg1 : i32, i32, i32
  }
}

</mosaic_0001>

<llo_original>
// kernel: tpu_custom_call.1
$region0: #{tpu_custom_call.1}
  #allocation0 [shape = 'u32[]', space=smem, size = 0x4, offset = 0x4, fixed_abs, tag = 'smem constant byte address 0x4 - core index']
  #allocation1 [shape = 'u32[144,128]{1,0:T(1,128)}', space=vmem, size = 0x12000, scoped, tag = 'internal scratch']
  %s0 = inlined_call_operand.hbm [shape: f32[2,32,512], index: 0, kind: input, shape index: {}]
  %s1 = inlined_call_operand.vmem [shape: f32[8,32], index: 1, kind: input, shape index: {}]
  %s2 = inlined_call_operand.vmem [shape: f32[8,1], index: 2, kind: input, shape index: {}]
  %s3 = inlined_call_operand.hbm [shape: f32[2,8,512], index: 3, kind: output, shape index: {}]
  %s4 = sld [smem:[#allocation0]]
  $region49: #{tpu_custom_call.1} parent=0
    _
  %s6 = ssub.s32 1, %s4
  %s7 = scalar_select 0, %s6, %s4
  $region1: #{tpu_custom_call.1} parent=0
    #allocation2 [shape = 'u8[131072]{0}', space=vmem, size = 0x20000, scoped, tag = 'input window, operand 0']
    #allocation3 [shape = 's32[2]{0}', space=sflag, size = 0x8, scoped, tag = 'scoped memory for tpu_custom_call.1']
    #allocation4 [shape = 's32[2]{0}', space=sflag, size = 0x8, scoped, tag = 'scoped memory for tpu_custom_call.1']
    #allocation5 [shape = 'u8[32768]{0}', space=vmem, size = 0x8000, scoped, tag = 'output window, operand 0']
    %8 = vsyncpa [#allocation3], 0
    %s9 = scalar_lea.sflag [#allocation3], 1
    %10 = vsyncpa %s9, 0
    %11 = vsyncpa [#allocation4], 0
    %s12 = scalar_lea.sflag [#allocation4], 1
    %13 = vsyncpa %s12, 0
    loop: start=0, step=1, limit=4
    $region2: #{tpu_custom_call.1} parent=1 // loop_pre_header
      _
    $region3: #{tpu_custom_call.1} parent=1 // loop_header
      %s15 = sphi 0, %s19
      %p16 = scmp.ge.s32.totalorder %s15, 4
      %s22 = sphi 0, %s34
      %s23 = sphi 0, %s30
      %s24 = sphi 0, %s22
      %s25 = sphi 0, %s23
      %s26 = sphi 0, %s24
      %s27 = sphi 0, %s25
      %s39 = sphi 0, %s41
      %s42 = sphi 0, %s39
      %s43 = sphi 0, %s42
      %s59 = sphi 0, %s43
      %s63 = sphi 0, %s63
      %s65 = sphi 0, %s63
      %s66 = sphi 0, %s65
      %s80 = sphi 0, %s66
      %s84 = sphi 0, %s84
      %s86 = sphi 0, %s84
      %s87 = sphi 0, %s86
      %s101 = sphi 0, %s87
      %s109 = sphi 0, %s111
      %s112 = sphi 0, %s109
      %s113 = sphi 0, %s112
      %s129 = sphi 0, %s113
    $region4: #{tpu_custom_call.1} parent=1 // loop_header_branch
      %18 = sbr.rel (%p16) target = $region8
    $region5: #{tpu_custom_call.1} parent=1 // loop_body
      %s20 = ssub.s32 %s15, 1
      %s21 = ssub.s32 %s15, 2
      %s28 = sadd.s32 1, %s23
      %p29 = scmp.ge.s32.totalorder %s28, 1
      %s30 = scalar_select %p29, 0, %s28
      %s31 = sadd.s32 1, %s22
      %s32 = scalar_select %p29, %s31, %s22
      %p33 = scmp.ge.s32.totalorder %s32, 2
      %s34 = scalar_select %p33, 0, %s32
      %s35 = ssub.s32 %s22, %s34
      %s36 = ssub.s32 %s23, %s30
      %s37 = sor.u32 %s35, %s36
      %p38 = scmp.eq.s32.totalorder %s37, 0
      %s40 = sadd.s32 %s39, 1
      %s41 = scalar_select %p38, %s39, %s40
      %p44 = pneg %p38
      %p45 = scmp.eq.s32.totalorder %s15, 1
      %p46 = por %p44, %p45
      %p47 = scmp.ne.s32.totalorder %s39, %s42
      %p48 = scmp.eq.s32.totalorder %s15, 0
      %p49 = por %p47, %p48
      %p50 = scmp.ne.s32.totalorder %s39, %s42
      %p51 = scmp.eq.s32.totalorder %s20, 1
      %p52 = por %p50, %p51
      %p53 = scmp.ne.s32.totalorder %s42, %s43
      %p54 = scmp.eq.s32.totalorder %s20, 0
      %p55 = por %p53, %p54
      %p56 = scmp.ne.s32.totalorder %s42, %s43
      %p57 = scmp.eq.s32.totalorder %s21, 1
      %p58 = por %p56, %p57
      %p60 = scmp.ne.s32.totalorder %s43, %s59
      %p61 = scmp.eq.s32.totalorder %s21, 0
      %p62 = por %p60, %p61
      %s64 = sadd.s32 %s63, 1
      %p67 = scmp.eq.s32.totalorder %s15, 1
      %p68 = scmp.ne.s32.totalorder %s63, %s65
      %p69 = scmp.eq.s32.totalorder %s15, 0
      %p70 = por %p68, %p69
      %p71 = scmp.ne.s32.totalorder %s63, %s65
      %p72 = scmp.eq.s32.totalorder %s20, 1
      %p73 = por %p71, %p72
      %p74 = scmp.ne.s32.totalorder %s65, %s66
      %p75 = scmp.eq.s32.totalorder %s20, 0
      %p76 = por %p74, %p75
      %p77 = scmp.ne.s32.totalorder %s65, %s66
      %p78 = scmp.eq.s32.totalorder %s21, 1
      %p79 = por %p77, %p78
      %p81 = scmp.ne.s32.totalorder %s66, %s80
      %p82 = scmp.eq.s32.totalorder %s21, 0
      %p83 = por %p81, %p82
      %s85 = sadd.s32 %s84, 1
      %p88 = scmp.eq.s32.totalorder %s15, 1
      %p89 = scmp.ne.s32.totalorder %s84, %s86
      %p90 = scmp.eq.s32.totalorder %s15, 0
      %p91 = por %p89, %p90
      %p92 = scmp.ne.s32.totalorder %s84, %s86
      %p93 = scmp.eq.s32.totalorder %s20, 1
      %p94 = por %p92, %p93
      %p95 = scmp.ne.s32.totalorder %s86, %s87
      %p96 = scmp.eq.s32.totalorder %s20, 0
      %p97 = por %p95, %p96
      %p98 = scmp.ne.s32.totalorder %s86, %s87
      %p99 = scmp.eq.s32.totalorder %s21, 1
      %p100 = por %p98, %p99
      %p102 = scmp.ne.s32.totalorder %s87, %s101
      %p103 = scmp.eq.s32.totalorder %s21, 0
      %p104 = por %p102, %p103
      %s105 = ssub.s32 %s22, %s34
      %s106 = ssub.s32 %s23, %s30
      %s107 = sor.u32 %s105, %s106
      %p108 = scmp.eq.s32.totalorder %s107, 0
      %s110 = sadd.s32 %s109, 1
      %s111 = scalar_select %p108, %s109, %s110
      %p114 = pneg %p108
      %p115 = scmp.eq.s32.totalorder %s15, 1
      %p116 = por %p114, %p115
      %p117 = scmp.ne.s32.totalorder %s109, %s112
      %p118 = scmp.eq.s32.totalorder %s15, 0
      %p119 = por %p117, %p118
      %p120 = scmp.ne.s32.totalorder %s109, %s112
      %p121 = scmp.eq.s32.totalorder %s20, 1
      %p122 = por %p120, %p121
      %p123 = scmp.ne.s32.totalorder %s112, %s113
      %p124 = scmp.eq.s32.totalorder %s20, 0
      %p125 = por %p123, %p124
      %p126 = scmp.ne.s32.totalorder %s112, %s113
      %p127 = scmp.eq.s32.totalorder %s21, 1
      %p128 = por %p126, %p127
      %p130 = scmp.ne.s32.totalorder %s113, %s129
      %p131 = scmp.eq.s32.totalorder %s21, 0
      %p132 = por %p130, %p131
      %p133 = scmp.le.s32.totalorder 1, %s15
      %p134 = scmp.lt.s32.totalorder %s15, 3
      %p135 = pnand %p133, %p134
      %p136 = pneg %p135
      // Predicated region
      $region9: #{tpu_custom_call.1} parent=5 // pred_check
        _
      $region10: #{tpu_custom_call.1} parent=5 // pred_check_branch
        %138 = sbr.rel (%p135) target = $region12
      $region11: #{tpu_custom_call.1} parent=5 // pred_region
        %s139 = ssub.s32 %s15, 1
        // Predicated region
        $region13: #{tpu_custom_call.1} parent=11 // pred_check
          %p140 = pneg %p76
        $region14: #{tpu_custom_call.1} parent=11 // pred_check_branch
          %142 = sbr.rel (%p140) target = $region16
        $region15: #{tpu_custom_call.1} parent=11 // pred_region
          _
        $region16: #{tpu_custom_call.1} parent=11 // pred_fallthru
          _
        // Predicated region
        $region17: #{tpu_custom_call.1} parent=11 // pred_check
          %p143 = pneg %p97
        $region18: #{tpu_custom_call.1} parent=11 // pred_check_branch
          %145 = sbr.rel (%p143) target = $region20
        $region19: #{tpu_custom_call.1} parent=11 // pred_region
          _
        $region20: #{tpu_custom_call.1} parent=11 // pred_fallthru
          _
      $region12: #{tpu_custom_call.1} parent=5 // pred_fallthru
        _
      %p146 = scmp.lt.s32.totalorder %s15, 2
      // Predicated region
      $region21: #{tpu_custom_call.1} parent=5 // pred_check
        %p147 = pneg %p146
      $region22: #{tpu_custom_call.1} parent=5 // pred_check_branch
        %149 = sbr.rel (%p147) target = $region24
      $region23: #{tpu_custom_call.1} parent=5 // pred_region
        // Predicated region
        $region25: #{tpu_custom_call.1} parent=23 // pred_check
          %p150 = pneg %p49
        $region26: #{tpu_custom_call.1} parent=23 // pred_check_branch
          %152 = sbr.rel (%p150) target = $region28
        $region27: #{tpu_custom_call.1} parent=23 // pred_region
          %s153 = sand.u32 %s39, 1
          %s154 = scalar_lea.sflag [#allocation3], %s153
          %s155 = sand.u32 %s39, 1
          %s156 = smul.addr %s155, 128
          %s157 = scalar_lea.vmem [#allocation2], %s156
          %s158 = smul.u32 4, %s23
          %s160 = ssub.s32 2048, 2048
          %161 = vsyncadd %s154, %s160
          %s162 = smul.addr %s22, 16
          %s163 = sadd.s32 %s158, %s162
          %s164 = smul.addr %s163, 128
          %s165 = scalar_lea.hbm %s0, %s164
          %s166 = sshll.u32 %s157, 4
          %s167 = int_to_ptr.vmem [resolvable:$true] %s166
          %172 = dma.hbm_to_vmem [thread:$0]  %s165, 2048, %s167, %s154, 512, 512, 32
        $region28: #{tpu_custom_call.1} parent=23 // pred_fallthru
          _
      $region24: #{tpu_custom_call.1} parent=5 // pred_fallthru
        _
      %p173 = scmp.le.s32.totalorder 1, %s15
      %p174 = scmp.lt.s32.totalorder %s15, 3
      %p175 = pnand %p173, %p174
      %p176 = pneg %p175
      // Predicated region
      $region29: #{tpu_custom_call.1} parent=5 // pred_check
        _
      $region30: #{tpu_custom_call.1} parent=5 // pred_check_branch
        %178 = sbr.rel (%p175) target = $region32
      $region31: #{tpu_custom_call.1} parent=5 // pred_region
        %s179 = ssub.s32 %s15, 1
        %s180 = sand.u32 %s42, 1
        %s181 = scalar_lea.sflag [#allocation3], %s180
        %s182 = sand.u32 %s42, 1
        %s183 = smul.addr %s182, 128
        %s184 = scalar_lea.vmem [#allocation2], %s183
        // Predicated region
        $region33: #{tpu_custom_call.1} parent=31 // pred_check
          %p185 = pneg %p55
        $region34: #{tpu_custom_call.1} parent=31 // pred_check_branch
          %187 = sbr.rel (%p185) target = $region36
        $region35: #{tpu_custom_call.1} parent=31 // pred_region
          %188 = dma.done %s181, 2048
        $region36: #{tpu_custom_call.1} parent=31 // pred_fallthru
          _
        %s189 = sand.u32 %s42, 1
        %s190 = scalar_lea.sflag [#allocation3], %s189
        %s191 = sand.u32 %s42, 1
        %s192 = smul.addr %s191, 128
        %s193 = scalar_lea.vmem [#allocation2], %s192
        %p194 = pneg %p55
        %p195 = pneg %p52
        %p196 = pneg %p76
        %p197 = pneg %p73
        %p198 = pneg %p97
        %p199 = pneg %p94
        %p200 = pneg %p125
        %p201 = pneg %p122
        %s202 = sand.u32 %s112, 1
        %s203 = scalar_lea.sflag [#allocation4], %s202
        %s204 = sand.u32 %s112, 1
        %s205 = smul.addr %s204, 32
        %s206 = scalar_lea.vmem [#allocation5], %s205
        %s207 = smul.u32 4, %s25
        %s208 = smul.u32 4, %s25
        %v209 = vld [vmem:[%s1] sm:$0xff]
        %v210 = vld [vmem:[%s184] sm:$0xff]
        %v211 = vld [vmem:[%s184 + $0x8] sm:$0xff]
        %v212 = vld [vmem:[%s184 + $0x10] sm:$0xff]
        %v213 = vld [vmem:[%s184 + $0x18] sm:$0xff]
        %v214 = vld [vmem:[%s184 + $0x20] sm:$0xff]
        %v215 = vld [vmem:[%s184 + $0x28] sm:$0xff]
        %v216 = vld [vmem:[%s184 + $0x30] sm:$0xff]
        %v217 = vld [vmem:[%s184 + $0x38] sm:$0xff]
        %v218 = vld [vmem:[%s184 + $0x40] sm:$0xff]
        %v219 = vld [vmem:[%s184 + $0x48] sm:$0xff]
        %v220 = vld [vmem:[%s184 + $0x50] sm:$0xff]
        %v221 = vld [vmem:[%s184 + $0x58] sm:$0xff]
        %v222 = vld [vmem:[%s184 + $0x60] sm:$0xff]
        %v223 = vld [vmem:[%s184 + $0x68] sm:$0xff]
        %v224 = vld [vmem:[%s184 + $0x70] sm:$0xff]
        %v225 = vld [vmem:[%s184 + $0x78] sm:$0xff]
        %v226 = vld [vmem:[%s2] sm:$0xff]
        %228 = vset.pattern.permute.xlu0 0
        %229 = vperm.xlu0 %228, %v226
        %v230 = vpop.permute.xlu0 %229
        %vm232 = vcmask 261120
        %v234 = vsel %vm232, %v209, 0
        %236 = vmatprep.subr.mxu0 %v211
        %237 = vmatpush1.msra.mxu0 %v210
        %238 = vmatprep.subr.mxu0 %v215
        %239 = vmatpush1.msra.mxu0 %v214
        %240 = vmatprep.subr.mxu0 %v219
        %241 = vmatpush1.msra.mxu0 %v218
        %242 = vmatprep.subr.mxu0 %v223
        %243 = vmatpush1.msra.mxu0 %v222
        %244 = vmatprep.subr.mxu0 0.0
        %245 = vmatpush1.msra.mxu0 0.0
        %246 = vmatprep.subr.mxu0 0.0
        %247 = vmatpush1.msra.mxu0 0.0
        %248 = vmatprep.subr.mxu0 0.0
        %249 = vmatpush1.msra.mxu0 0.0
        %250 = vmatprep.subr.mxu0 0.0
        %251 = vmatpush1.msra.mxu0 0.0
        %252 = vmatprep.subr.mxu0 0.0
        %253 = vmatpush1.msra.mxu0 0.0
        %254 = vmatprep.subr.mxu0 0.0
        %255 = vmatpush1.msra.mxu0 0.0
        %256 = vmatprep.subr.mxu0 0.0
        %257 = vmatpush1.msra.mxu0 0.0
        %258 = vmatprep.subr.mxu0 0.0
        %259 = vmatpush1.msra.mxu0 0.0
        %260 = vmatprep.subr.mxu0 0.0
        %261 = vmatpush1.msra.mxu0 0.0
        %262 = vmatprep.subr.mxu0 0.0
        %263 = vmatpush1.msra.mxu0 0.0
        %264 = vmatprep.subr.mxu0 0.0
        %265 = vmatpush1.msra.mxu0 0.0
        %266 = vmatprep.subr.mxu0 0.0
        %267 = vmatpush1.msra.mxu0 0.0
        %268 = vmatprep.subr.mxu0 0.0
        %269 = vmatpush1.msra.mxu0 0.0
        %270 = vmatprep.subr.mxu0 0.0
        %271 = vmatpush1.msra.mxu0 0.0
        %272 = vmatprep.subr.mxu0 0.0
        %273 = vmatpush1.msra.mxu0 0.0
        %274 = vmatprep.subr.mxu0 0.0
        %275 = vmatpush1.msra.mxu0 0.0
        %276 = vmatprep.subr.mxu0 0.0
        %277 = vmatpush1.msra.mxu0 0.0
        %278 = vmatprep.subr.mxu0 0.0
        %279 = vmatpush1.msra.mxu0 0.0
        %280 = vmatprep.subr.mxu0 0.0
        %281 = vmatpush1.msra.mxu0 0.0
        %282 = vmatprep.subr.mxu0 0.0
        %283 = vmatpush1.msra.mxu0 0.0
        %284 = vmatprep.subr.mxu0 0.0
        %285 = vmatpush1.msra.mxu0 0.0
        %286 = vmatprep.subr.mxu0 0.0
        %287 = vmatpush1.msra.mxu0 0.0
        %288 = vmatprep.subr.mxu0 0.0
        %289 = vmatpush1.msra.mxu0 0.0
        %290 = vmatprep.subr.mxu0 0.0
        %291 = vmatpush1.msra.mxu0 0.0
        %292 = vmatprep.subr.mxu0 0.0
        %293 = vmatpush1.msra.mxu0 0.0
        %294 = vmatprep.subr.mxu0 0.0
        %295 = vmatpush1.msra.mxu0 0.0
        %296 = vmatprep.subr.mxu0 0.0
        %297 = vmatpush1.msra.mxu0 0.0
        %298 = vmatprep.subr.mxu0 0.0
        %299 = vmatpush1.msra.mxu0 0.0
        %300 = vmatprep.mubr.f32.mxu0 0.0
        %301 = vmatmul.mubr.f32.gmra.mrb[0].mxu0 %v234
        %v302 = vpop.f32.mrb[0].mxu0
        %v303 = vadd.f32 %v230, %v302
        %v304 = vpop.f32.mrb[0].mxu0
        %v305 = vadd.f32 %v230, %v304
        %306 = vdwg.mxu0
        %307 = vmatprep.subr.mxu0 %v213
        %308 = vmatpush1.msra.mxu0 %v212
        %309 = vmatprep.subr.mxu0 %v217
        %310 = vmatpush1.msra.mxu0 %v216
        %311 = vmatprep.subr.mxu0 %v221
        %312 = vmatpush1.msra.mxu0 %v220
        %313 = vmatprep.subr.mxu0 %v225
        %314 = vmatpush1.msra.mxu0 %v224
        %315 = vmatprep.subr.mxu0 0.0
        %316 = vmatpush1.msra.mxu0 0.0
        %317 = vmatprep.subr.mxu0 0.0
        %318 = vmatpush1.msra.mxu0 0.0
        %319 = vmatprep.subr.mxu0 0.0
        %320 = vmatpush1.msra.mxu0 0.0
        %321 = vmatprep.subr.mxu0 0.0
        %322 = vmatpush1.msra.mxu0 0.0
        %323 = vmatprep.subr.mxu0 0.0
        %324 = vmatpush1.msra.mxu0 0.0
        %325 = vmatprep.subr.mxu0 0.0
        %326 = vmatpush1.msra.mxu0 0.0
        %327 = vmatprep.subr.mxu0 0.0
        %328 = vmatpush1.msra.mxu0 0.0
        %329 = vmatprep.subr.mxu0 0.0
        %330 = vmatpush1.msra.mxu0 0.0
        %331 = vmatprep.subr.mxu0 0.0
        %332 = vmatpush1.msra.mxu0 0.0
        %333 = vmatprep.subr.mxu0 0.0
        %334 = vmatpush1.msra.mxu0 0.0
        %335 = vmatprep.subr.mxu0 0.0
        %336 = vmatpush1.msra.mxu0 0.0
        %337 = vmatprep.subr.mxu0 0.0
        %338 = vmatpush1.msra.mxu0 0.0
        %339 = vmatprep.subr.mxu0 0.0
        %340 = vmatpush1.msra.mxu0 0.0
        %341 = vmatprep.subr.mxu0 0.0
        %342 = vmatpush1.msra.mxu0 0.0
        %343 = vmatprep.subr.mxu0 0.0
        %344 = vmatpush1.msra.mxu0 0.0
        %345 = vmatprep.subr.mxu0 0.0
        %346 = vmatpush1.msra.mxu0 0.0
        %347 = vmatprep.subr.mxu0 0.0
        %348 = vmatpush1.msra.mxu0 0.0
        %349 = vmatprep.subr.mxu0 0.0
        %350 = vmatpush1.msra.mxu0 0.0
        %351 = vmatprep.subr.mxu0 0.0
        %352 = vmatpush1.msra.mxu0 0.0
        %353 = vmatprep.subr.mxu0 0.0
        %354 = vmatpush1.msra.mxu0 0.0
        %355 = vmatprep.subr.mxu0 0.0
        %356 = vmatpush1.msra.mxu0 0.0
        %357 = vmatprep.subr.mxu0 0.0
        %358 = vmatpush1.msra.mxu0 0.0
        %359 = vmatprep.subr.mxu0 0.0
        %360 = vmatpush1.msra.mxu0 0.0
        %361 = vmatprep.subr.mxu0 0.0
        %362 = vmatpush1.msra.mxu0 0.0
        %363 = vmatprep.subr.mxu0 0.0
        %364 = vmatpush1.msra.mxu0 0.0
        %365 = vmatprep.subr.mxu0 0.0
        %366 = vmatpush1.msra.mxu0 0.0
        %367 = vmatprep.subr.mxu0 0.0
        %368 = vmatpush1.msra.mxu0 0.0
        %369 = vmatprep.subr.mxu0 0.0
        %370 = vmatpush1.msra.mxu0 0.0
        %371 = vmatprep.mubr.f32.mxu0 0.0
        %372 = vmatmul.mubr.f32.gmra.mrb[0].mxu0 %v234
        %v373 = vpop.f32.mrb[0].mxu0
        %v374 = vadd.f32 %v230, %v373
        %v375 = vpop.f32.mrb[0].mxu0
        %v376 = vadd.f32 %v230, %v375
        %377 = vdwg.mxu0
        %378 = vst [vmem:[%s206] sm:$0xff] %v303
        %379 = vst [vmem:[%s206 + $0x8] sm:$0xff] %v305
        %380 = vst [vmem:[%s206 + $0x10] sm:$0xff] %v374
        %381 = vst [vmem:[%s206 + $0x18] sm:$0xff] %v376
        %s382 = sand.u32 %s112, 1
        %s383 = scalar_lea.sflag [#allocation4], %s382
        %s384 = sand.u32 %s112, 1
        %s385 = smul.addr %s384, 32
        %s386 = scalar_lea.vmem [#allocation5], %s385
        // Predicated region
        $region37: #{tpu_custom_call.1} parent=31 // pred_check
          %p387 = pneg %p122
        $region38: #{tpu_custom_call.1} parent=31 // pred_check_branch
          %389 = sbr.rel (%p387) target = $region40
        $region39: #{tpu_custom_call.1} parent=31 // pred_region
          %s390 = smul.u32 4, %s25
          %s392 = ssub.s32 512, 512
          %393 = vsyncadd %s383, %s392
          %s394 = smul.addr %s24, 4
          %s395 = sadd.s32 %s390, %s394
          %s396 = smul.addr %s395, 128
          %s397 = scalar_lea.hbm %s3, %s396
          %s399 = sshll.u32 %s386, 4
          %s400 = int_to_ptr.vmem [resolvable:$true] %s399
          %402 = dma.vmem_to_hbm [thread:$0]  %s400, 512, %s397, %s383
        $region40: #{tpu_custom_call.1} parent=31 // pred_fallthru
          _
      $region32: #{tpu_custom_call.1} parent=5 // pred_fallthru
        _
      %p403 = scmp.le.s32.totalorder 2, %s15
      // Predicated region
      $region41: #{tpu_custom_call.1} parent=5 // pred_check
        %p404 = pneg %p403
      $region42: #{tpu_custom_call.1} parent=5 // pred_check_branch
        %406 = sbr.rel (%p404) target = $region44
      $region43: #{tpu_custom_call.1} parent=5 // pred_region
        %s407 = ssub.s32 %s15, 2
        // Predicated region
        $region45: #{tpu_custom_call.1} parent=43 // pred_check
          %p408 = pneg %p128
        $region46: #{tpu_custom_call.1} parent=43 // pred_check_branch
          %410 = sbr.rel (%p408) target = $region48
        $region47: #{tpu_custom_call.1} parent=43 // pred_region
          %s411 = sand.u32 %s113, 1
          %s412 = scalar_lea.sflag [#allocation4], %s411
          %s413 = sand.u32 %s113, 1
          %s414 = smul.addr %s413, 32
          %s415 = scalar_lea.vmem [#allocation5], %s414
          %416 = dma.done %s412, 512
        $region48: #{tpu_custom_call.1} parent=43 // pred_fallthru
          _
      $region44: #{tpu_custom_call.1} parent=5 // pred_fallthru
        _
    $region6: #{tpu_custom_call.1} parent=1 // loop_footer
      %s19 = sadd.s32 1, %s15
    $region7: #{tpu_custom_call.1} parent=1 // loop_footer_branch
      %14 = sbr.rel target = $region3
    $region8: #{tpu_custom_call.1} parent=1 // loop_exit
      _
    %417 = vsyncpa [#allocation3], 1
    %s418 = scalar_lea.sflag [#allocation3], 1
    %419 = vsyncpa %s418, 1
    %420 = vsyncpa [#allocation4], 1
    %s421 = scalar_lea.sflag [#allocation4], 1
    %422 = vsyncpa %s421, 1

</llo_original>
